<compile_context>
chip_gen: v6e
topology: v6e:2x2x1
jax: 0.10.0
libtpu: 0.0.40
codegen_flags: <defaults>
</compile_context>

<pallas_src>
import jax
import jax.numpy as jnp
from jax.experimental import pallas as pl
from jax.experimental.pallas import tpu as pltpu


def _round_down(x, m):
    return (x // m) * m


def _make_mask_kernel(resident_scale, row_block):
    """Kernel factory. `resident_scale` / `row_block` are static Python values."""
    if resident_scale:
        def kernel(p_ref, x_ref, o_ref):
            # p_ref holds the full (padded) per-row scale, resident across the
            # whole grid; slice out this block's rows (start is block-aligned).
            start = pl.multiple_of(pl.program_id(0) * row_block, row_block)
            o_ref[...] = x_ref[...] * p_ref[pl.ds(start, row_block), :]
    else:
        def kernel(p_ref, x_ref, o_ref):
            o_ref[...] = x_ref[...] * p_ref[...]
    return kernel


def mask_1channel(
    x,
    p,
    *,
    target_block_bytes=4 * 1024 * 1024,
    vmem_limit_bytes=32 * 1024 * 1024,
    donate_x=False,
):
    """x: (N, C, H, W); p: (1, C, 1, 1). Returns p * x (PyTorch broadcasting)."""
    N, C, H, W = x.shape
    rows, cols = N * C, H * W
    dtype = x.dtype
    itemsize = jnp.dtype(dtype).itemsize
    # Native packed sublane tile: 8 (f32) / 16 (bf16,f16) / 32 (int8,fp8).
    sublane = max(8, 32 // itemsize)

    # Zero-cost lane-dense flatten.
    x2 = x.reshape(rows, cols)
    # Per-row scale (repeat per-channel vector across the batch dim).
    p_rows = jnp.broadcast_to(p.reshape(1, C), (N, C)).reshape(rows, 1).astype(dtype)

    # ---------------- tile sizing ----------------
    if cols * itemsize * sublane <= target_block_bytes:
        # Full-width blocks; tile the row axis only.
        col_block = cols
        rb = max(sublane, _round_down(target_block_bytes // (cols * itemsize), sublane))
        if rows <= sublane:
            row_block = rows                      # full dim (always legal)
        elif rb >= rows:
            # Whole tensor fits one block: split rows ~in half so the parallel
            # grid still shards across both v7x TensorCores.
            row_block = sublane * pl.cdiv(pl.cdiv(rows, 2), sublane)
        else:
            row_block = max(sublane, _round_down(rb, sublane))
    else:
        # Very wide rows: tile columns too (128-multiple col blocks).
        col_block = max(128, _round_down(target_block_bytes // (sublane * itemsize), 128))
        col_block = min(col_block, _round_down(cols, 128))
        row_block = rows if rows <= sublane else sublane

    num_row_blocks = pl.cdiv(rows, row_block)
    num_col_blocks = pl.cdiv(cols, col_block)
    grid = (num_row_blocks, num_col_blocks)

    # Keep the (tiny) scale resident in VMEM when its lane-padded footprint is
    # small; otherwise DMA a per-block slice each step.
    padded_rows = num_row_blocks * row_block
    resident_scale = padded_rows * 128 * itemsize <= (1 << 20)
    if resident_scale and padded_rows > rows:
        p_rows = jnp.pad(p_rows, ((0, padded_rows - rows), (0, 0)))

    if resident_scale:
        p_spec = pl.BlockSpec((padded_rows, 1), lambda i, j: (0, 0))  # fetched once
    else:
        p_spec = pl.BlockSpec((row_block, 1), lambda i, j: (i, 0))

    out2 = pl.pallas_call(
        _make_mask_kernel(resident_scale, row_block),
        out_shape=jax.ShapeDtypeStruct((rows, cols), dtype),
        grid=grid,
        in_specs=[
            p_spec,
            pl.BlockSpec((row_block, col_block), lambda i, j: (i, j)),
        ],
        out_specs=pl.BlockSpec((row_block, col_block), lambda i, j: (i, j)),
        compiler_params=pltpu.CompilerParams(
            dimension_semantics=("parallel", "parallel"),
            vmem_limit_bytes=vmem_limit_bytes,
        ),
        input_output_aliases=({1: 0} if donate_x else {}),
    )(p_rows, x2)

    return out2.reshape(N, C, H, W)


def make_mask_param(c, dtype=jnp.float32):
    """Deterministic init matching Mask_1Chanle.__init__:
    ones((1, c, 1, 1)) with every even channel set to -1."""
    idx = jnp.arange(c)
    signs = jnp.where(idx % 2 == 0, -1.0, 1.0).astype(dtype)
    return signs.reshape(1, c, 1, 1)


if __name__ == "__main__":
    key = jax.random.PRNGKey(0)
    k0, k1, k2 = jax.random.split(key, 3)

    # Primary shape from the module spec.
    N, C, H, W = 2, 4, 16, 16
    x = jax.random.normal(k0, (N, C, H, W), dtype=jnp.float32)
    p = make_mask_param(C)
    y = jax.block_until_ready(mask_1channel(x, p))
    assert y.shape == (N, C, H, W)
    assert jnp.allclose(y, p * x, atol=1e-6, rtol=1e-6)

    # Odd / unaligned shape: full-dim (non 8/128-aligned) blocks.
    x_odd = jax.random.normal(k1, (2, 3, 5, 7), dtype=jnp.float32)
    p_odd = make_mask_param(3)
    y_odd = jax.block_until_ready(mask_1channel(x_odd, p_odd))
    assert jnp.allclose(y_odd, p_odd * x_odd, atol=1e-6, rtol=1e-6)

    # Multi-block shape: exercises the >=2 row-block split (megacore path).
    x_big = jax.random.normal(k2, (4, 8, 32, 32), dtype=jnp.float32)
    p_big = make_mask_param(8)
    y_big = jax.block_until_ready(mask_1channel(x_big, p_big))
    assert jnp.allclose(y_big, p_big * x_big, atol=1e-6, rtol=1e-6)

    print("KERNEL_OK")
</pallas_src>

<mosaic_0001>
module attributes {stable_mosaic.version = 11 : i64} {
  func.func @kernel(%arg0: i32, %arg1: i32, %arg2: memref<8x1xf32, #tpu.memory_space<vmem>>, %arg3: memref<8x256xf32, #tpu.memory_space<vmem>>, %arg4: memref<8x256xf32, #tpu.memory_space<vmem>>) attributes {dimension_semantics = [#tpu.dimension_semantics<parallel>, #tpu.dimension_semantics<parallel>], iteration_bounds = array<i64: 1, 1>, scalar_prefetch = 0 : i64, scratch_operands = 0 : i64, tpu.core_type = #tpu.core_type<tc>, window_params = [{pipeline_mode = #tpu.pipeline_mode<synchronous>, transform_indices = @transform_0, window_bounds = array<i64: 8, 1>}, {transform_indices = @transform_1, window_bounds = array<i64: 8, 256>}, {transform_indices = @transform_2, window_bounds = array<i64: 8, 256>}]} {
    %c8_i32 = arith.constant 8 : i32
    %0 = arith.muli %arg0, %c8_i32 : i32
    %1 = tpu.assume_multiple %0, 8 : i32
    %c0 = arith.constant 0 : index
    %c0_0 = arith.constant 0 : index
    %2 = vector.load %arg3[%c0, %c0_0] : memref<8x256xf32, #tpu.memory_space<vmem>>, vector<8x256xf32>
    %3 = arith.index_cast %1 : i32 to index
    %c0_1 = arith.constant 0 : index
    %4 = vector.load %arg2[%3, %c0_1] : memref<8x1xf32, #tpu.memory_space<vmem>>, vector<8x1xf32>
    %5 = vector.broadcast %4 : vector<8x1xf32> to vector<8x256xf32>
    %6 = arith.mulf %2, %5 : vector<8x256xf32>
    %c0_2 = arith.constant 0 : index
    %c0_3 = arith.constant 0 : index
    %7 = vector.load %arg4[%c0_2, %c0_3] : memref<8x256xf32, #tpu.memory_space<vmem>>, vector<8x256xf32>
    tpu.vector_store %arg4[%c0_2, %c0_3], %6 {strides = array<i32>} : memref<8x256xf32, #tpu.memory_space<vmem>>, vector<8x256xf32>,
    return
  }
  func.func @transform_0(%arg0: i32, %arg1: i32) -> (i32, i32) {
    %c0_i32 = arith.constant 0 : i32
    %c0_i32_0 = arith.constant 0 : i32
    %c0_i32_1 = arith.constant 0 : i32
    return %c0_i32, %c0_i32_0 : i32, i32
  }
  func.func @transform_1(%arg0: i32, %arg1: i32) -> (i32, i32) {
    %c0_i32 = arith.constant 0 : i32
    return %arg0, %arg1 : i32, i32
  }
  func.func @transform_2(%arg0: i32, %arg1: i32) -> (i32, i32) {
    %c0_i32 = arith.constant 0 : i32
    return %arg0, %arg1 : i32, i32
  }
}

</mosaic_0001>

<llo_original>
// kernel: tpu_custom_call.1
$region0: #{tpu_custom_call.1}
  #allocation0 [shape = 'u32[]', space=smem, size = 0x4, offset = 0x4, fixed_abs, tag = 'smem constant byte address 0x4 - core index']
  #allocation1 [shape = 'u32[144,128]{1,0:T(1,128)}', space=vmem, size = 0x12000, scoped, tag = 'internal scratch']
  %s0 = inlined_call_operand.vmem [shape: f32[8,1], index: 0, kind: input, shape index: {}]
  %s1 = inlined_call_operand.hbm [shape: f32[8,256], index: 1, kind: input, shape index: {}]
  %s2 = inlined_call_operand.hbm [shape: f32[8,256], index: 2, kind: output, shape index: {}]
  %s3 = sld [smem:[#allocation0]]
  $region22: #{tpu_custom_call.1} parent=0
    _
  %s5 = ssub.s32 1, %s3
  %s6 = scalar_select 0, %s5, %s3
  $region1: #{tpu_custom_call.1} parent=0
    #allocation2 [shape = 'u8[8192]{0}', space=vmem, size = 0x2000, scoped, tag = 'input window, operand 1, single buffered']
    #allocation3 [shape = 's32[1]{0}', space=sflag, size = 0x4, scoped, tag = 'scoped memory for tpu_custom_call.1']
    #allocation4 [shape = 's32[1]{0}', space=sflag, size = 0x4, scoped, tag = 'scoped memory for tpu_custom_call.1']
    #allocation5 [shape = 'u8[8192]{0}', space=vmem, size = 0x2000, scoped, tag = 'output window, operand 0, single buffered']
    %7 = vsyncpa [#allocation3], 0
    %8 = vsyncpa [#allocation4], 0
    // Predicated region
    $region2: #{tpu_custom_call.1} parent=1 // pred_check
      _
    $region3: #{tpu_custom_call.1} parent=1 // pred_check_branch
      %10 = sbr.rel (0) target = $region5
    $region4: #{tpu_custom_call.1} parent=1 // pred_region
      _
    $region5: #{tpu_custom_call.1} parent=1 // pred_fallthru
      _
    // Predicated region
    $region6: #{tpu_custom_call.1} parent=1 // pred_check
      _
    $region7: #{tpu_custom_call.1} parent=1 // pred_check_branch
      %12 = sbr.rel (0) target = $region9
    $region8: #{tpu_custom_call.1} parent=1 // pred_region
      %s14 = ssub.s32 256, 256
      %15 = vsyncadd [#allocation3], %s14
      %s17 = sshll.u32 [#allocation2], 4
      %s18 = int_to_ptr.vmem [resolvable:$true] %s17
      %20 = dma.hbm_to_vmem [thread:$0]  %s1, 256, %s18, [#allocation3]
    $region9: #{tpu_custom_call.1} parent=1 // pred_fallthru
      _
    // Predicated region
    $region10: #{tpu_custom_call.1} parent=1 // pred_check
      _
    $region11: #{tpu_custom_call.1} parent=1 // pred_check_branch
      %22 = sbr.rel (0) target = $region13
    $region12: #{tpu_custom_call.1} parent=1 // pred_region
      %23 = dma.done [#allocation3], 256
    $region13: #{tpu_custom_call.1} parent=1 // pred_fallthru
      _
    %s24 = smul.u32 0, 8
    %v25 = vld [vmem:[#allocation2] sm:$0xff]
    %v26 = vld [vmem:[#allocation2 + $0x8] sm:$0xff]
    %s27 = scalar_lea.vmem %s0, %s24
    %v28 = vld [vmem:[%s27] sm:$0xff]
    %30 = vset.pattern.permute.xlu0 0
    %31 = vperm.xlu0 %30, %v28
    %v32 = vpop.permute.xlu0 %31
    %v34 = vmul.f32 %v25, %v32
    %v35 = vmul.f32 %v26, %v32
    %36 = vst [vmem:[#allocation5] sm:$0xff] %v34
    %37 = vst [vmem:[#allocation5 + $0x8] sm:$0xff] %v35
    // Predicated region
    $region14: #{tpu_custom_call.1} parent=1 // pred_check
      _
    $region15: #{tpu_custom_call.1} parent=1 // pred_check_branch
      %39 = sbr.rel (0) target = $region17
    $region16: #{tpu_custom_call.1} parent=1 // pred_region
      %s41 = ssub.s32 256, 256
      %42 = vsyncadd [#allocation4], %s41
      %s44 = sshll.u32 [#allocation5], 4
      %s45 = int_to_ptr.vmem [resolvable:$true] %s44
      %47 = dma.vmem_to_hbm [thread:$0]  %s45, 256, %s2, [#allocation4]
    $region17: #{tpu_custom_call.1} parent=1 // pred_fallthru
      _
    // Predicated region
    $region18: #{tpu_custom_call.1} parent=1 // pred_check
      _
    $region19: #{tpu_custom_call.1} parent=1 // pred_check_branch
      %49 = sbr.rel (0) target = $region21
    $region20: #{tpu_custom_call.1} parent=1 // pred_region
      %50 = dma.done [#allocation4], 256
    $region21: #{tpu_custom_call.1} parent=1 // pred_fallthru
      _
    %51 = vsyncpa [#allocation3], 1
    %52 = vsyncpa [#allocation4], 1

</llo_original>
